<compile_context>
chip_gen: v7x
topology: tpu7x:2x2x1
jax: 0.10.0
libtpu: 0.0.40
codegen_flags: <defaults>
</compile_context>

<pallas_src>
import jax
import jax.numpy as jnp
from jax import lax
from jax.experimental import pallas as pl
from jax.experimental.pallas import tpu as pltpu

COMBINE_EPS = 1e-4  # efficientdet "fastattn" epsilon
BN_EPS = 1e-5


def make_fnode_kernel(num_inputs, H, W, C):
    WC = W * C

    def kernel(wn_ref, *refs):
        # refs = (x_0, ..., x_{ni-1}, dwk, pdiag, scale, bias, out)
        x_refs = refs[:num_inputs]
        dwk_ref, pdiag_ref, scale_ref, bias_ref, o_ref = refs[num_inputs:]

        # ---- combine: fast-attention weighted sum (weights pre-normalized) ----
        # bf16 in HBM/VMEM, upcast per-tile to f32 (v5e VPU has no bf16).
        comb = x_refs[0][0].astype(jnp.float32) * wn_ref[0]
        for i in range(1, num_inputs):
            comb = comb + x_refs[i][0].astype(jnp.float32) * wn_ref[i]

        # ---- 3x3 depthwise conv (padding=1, no bias) on the (H, W*C) view ----
        # Neighbors are fetched with pltpu.roll (jnp.roll semantics) on the XLU and
        # the wrapped-around border values are masked to zero.
        row = lax.broadcasted_iota(jnp.int32, (H, WC), 0)
        lane = lax.broadcasted_iota(jnp.int32, (H, WC), 1)
        zero = jnp.zeros((H, WC), jnp.float32)

        def shift_v(a, dh):  # out[h, :] = a[h + dh, :], zero outside [0, H)
            if dh == 0:
                return a
            rolled = pltpu.roll(a, (-dh) % H, 0)
            if dh > 0:
                return jnp.where(row < H - dh, rolled, zero)
            return jnp.where(row >= -dh, rolled, zero)

        def shift_h(a, dw):  # out[:, w*C+c] = a[:, (w+dw)*C+c], zero outside [0, W)
            if dw == 0:
                return a
            rolled = pltpu.roll(a, (-dw * C) % WC, 1)
            if dw > 0:
                return jnp.where(lane < WC - dw * C, rolled, zero)
            return jnp.where(lane >= -dw * C, rolled, zero)

        dwk = dwk_ref[...]                      # (9, W*C) f32, lane-tiled per channel
        acc = zero
        for i, dh in enumerate((-1, 0, 1)):
            va = shift_v(comb, dh)
            for j, dw in enumerate((-1, 0, 1)):
                tap = shift_h(va, dw)
                acc = acc + tap * dwk[3 * i + j:3 * i + j + 1, :]

        # ---- 1x1 pointwise conv: bf16 MXU matmul, K = N = W*C (lane-dense) ----
        y = jnp.dot(acc.astype(jnp.bfloat16), pdiag_ref[...],
                    preferred_element_type=jnp.float32)          # (H, W*C) f32

        # ---- folded BatchNorm (eval) + SiLU ----
        y = y * scale_ref[...] + bias_ref[...]
        o_ref[0] = y * jax.nn.sigmoid(y)        # lane-dense (H, W*C) store

    return kernel


def fnode_forward(xs, edge_weights, dw_w, pw_w, bn_scale, bn_bias):
    """xs: list of NHWC arrays (same shape, ideally bf16). Returns NHWC float32."""
    num_inputs = len(xs)
    N, H, W, C = xs[0].shape
    WC = W * C  # lane axis; a multiple of 128 gives dense vector ops / stores.

    # Activations: bf16, lane-dense (N, H, W*C) view. No stack / pad / f32 copy.
    xs_flat = [x.astype(jnp.bfloat16).reshape(N, H, WC) for x in xs]

    # Tiny one-time parameter preprocessing (host/XLA side).
    w = jnp.maximum(edge_weights.astype(jnp.float32), 0.0)
    wn = w / (jnp.sum(w) + COMBINE_EPS)                               # (ni,)
    dwk = jnp.tile(dw_w.astype(jnp.float32).reshape(9, C), (1, W))    # (9, W*C)
    # Block-diagonal pointwise weight: (W*C, W*C), block (w,w) = pw (C,C).
    pdiag = jnp.kron(jnp.eye(W, dtype=jnp.float32),
                     pw_w.astype(jnp.float32)).astype(jnp.bfloat16)   # (W*C, W*C)
    scale_l = jnp.tile(bn_scale.astype(jnp.float32).reshape(1, C), (1, W))  # (1, W*C)
    bias_l = jnp.tile(bn_bias.astype(jnp.float32).reshape(1, C), (1, W))    # (1, W*C)

    grid_spec = pltpu.PrefetchScalarGridSpec(
        num_scalar_prefetch=0,
        grid=(N,),
        in_specs=[
            pl.BlockSpec(memory_space=pltpu.MemorySpace.SMEM),        # wn scalars
            *[pl.BlockSpec((1, H, WC), lambda b: (b, 0, 0))
              for _ in range(num_inputs)],                            # x_i blocks
            pl.BlockSpec((9, WC), lambda b: (0, 0)),                  # depthwise w
            pl.BlockSpec((WC, WC), lambda b: (0, 0)),                 # pointwise w
            pl.BlockSpec((1, WC), lambda b: (0, 0)),                  # BN scale
            pl.BlockSpec((1, WC), lambda b: (0, 0)),                  # BN bias
        ],
        out_specs=pl.BlockSpec((1, H, WC), lambda b: (b, 0, 0)),
    )

    out_flat = pl.pallas_call(
        make_fnode_kernel(num_inputs, H, W, C),
        out_shape=jax.ShapeDtypeStruct((N, H, WC), jnp.float32),
        grid_spec=grid_spec,
        compiler_params=pltpu.CompilerParams(
            dimension_semantics=("parallel",)),   # batch blocks independent -> 2 TCs on v7x
    )(wn, *xs_flat, dwk, pdiag, scale_l, bias_l)

    # Free metadata reshape back to NHWC (outside the kernel).
    return out_flat.reshape(N, H, W, C)


if __name__ == "__main__":
    key = jax.random.PRNGKey(0)
    k_x0, k_x1, k_dw, k_pw, k_g, k_b, k_m, k_v = jax.random.split(key, 8)

    N, H, W, C = 2, 16, 16, 8          # W*C = 128 -> lane-dense
    num_inputs = 2

    # Activations live in bf16 (halves HBM traffic; kernel upcasts per-tile).
    x0 = jax.random.normal(k_x0, (N, H, W, C), jnp.float32).astype(jnp.bfloat16)
    x1 = jax.random.normal(k_x1, (N, H, W, C), jnp.float32).astype(jnp.bfloat16)

    # Fnode "edge weights" (FpnCombine.edge_weights), BiFPN init: ones.
    edge_weights = jnp.ones((num_inputs,), jnp.float32)

    # SeparableConv2d params.
    dw_w = 0.1 * jax.random.normal(k_dw, (3, 3, C), jnp.float32)   # depthwise (kh, kw, C)
    pw_w = 0.1 * jax.random.normal(k_pw, (C, C), jnp.float32)      # pointwise (Cin, Cout)

    # BatchNorm2d (eval) folded to scale & bias.
    gamma = 1.0 + 0.05 * jax.random.normal(k_g, (C,), jnp.float32)
    beta = 0.05 * jax.random.normal(k_b, (C,), jnp.float32)
    running_mean = 0.05 * jax.random.normal(k_m, (C,), jnp.float32)
    running_var = 1.0 + 0.1 * jax.nn.softplus(jax.random.normal(k_v, (C,), jnp.float32))
    bn_scale = gamma / jnp.sqrt(running_var + BN_EPS)
    bn_bias = beta - running_mean * bn_scale

    out = fnode_forward([x0, x1], edge_weights, dw_w, pw_w, bn_scale, bn_bias)
    out = jax.block_until_ready(out)
    assert out.shape == (N, H, W, C) and out.dtype == jnp.float32
    assert bool(jnp.all(jnp.isfinite(out)))
    print("KERNEL_OK")
</pallas_src>

<mosaic_0001>
module attributes {stable_mosaic.version = 11 : i64} {
  func.func @kernel(%arg0: i32, %arg1: memref<2xf32, #tpu.memory_space<smem>>, %arg2: memref<1x16x128xbf16, #tpu.memory_space<vmem>>, %arg3: memref<1x16x128xbf16, #tpu.memory_space<vmem>>, %arg4: memref<9x128xf32, #tpu.memory_space<vmem>>, %arg5: memref<128x128xbf16, #tpu.memory_space<vmem>>, %arg6: memref<1x128xf32, #tpu.memory_space<vmem>>, %arg7: memref<1x128xf32, #tpu.memory_space<vmem>>, %arg8: memref<1x16x128xf32, #tpu.memory_space<vmem>>) attributes {dimension_semantics = [#tpu.dimension_semantics<parallel>], iteration_bounds = array<i64: 2>, scalar_prefetch = 0 : i64, scratch_operands = 0 : i64, tpu.core_type = #tpu.core_type<tc>, window_params = [{transform_indices = @transform_0, window_bounds = array<i64: 2>}, {transform_indices = @transform_1, window_bounds = array<i64: 1, 16, 128>}, {transform_indices = @transform_2, window_bounds = array<i64: 1, 16, 128>}, {pipeline_mode = #tpu.pipeline_mode<synchronous>, transform_indices = @transform_3, window_bounds = array<i64: 9, 128>}, {pipeline_mode = #tpu.pipeline_mode<synchronous>, transform_indices = @transform_4, window_bounds = array<i64: 128, 128>}, {pipeline_mode = #tpu.pipeline_mode<synchronous>, transform_indices = @transform_5, window_bounds = array<i64: 1, 128>}, {pipeline_mode = #tpu.pipeline_mode<synchronous>, transform_indices = @transform_6, window_bounds = array<i64: 1, 128>}, {transform_indices = @transform_7, window_bounds = array<i64: 1, 16, 128>}]} {
    %c0 = arith.constant 0 : index
    %c0_0 = arith.constant 0 : index
    %c0_1 = arith.constant 0 : index
    %0 = vector.load %arg2[%c0, %c0_0, %c0_1] : memref<1x16x128xbf16, #tpu.memory_space<vmem>>, vector<1x16x128xbf16>
    %1 = vector.shape_cast %0 : vector<1x16x128xbf16> to vector<16x128xbf16>
    %2 = arith.extf %1 : vector<16x128xbf16> to vector<16x128xf32>
    %c0_2 = arith.constant 0 : index
    %3 = memref.load %arg1[%c0_2] : memref<2xf32, #tpu.memory_space<smem>>
    %4 = vector.broadcast %3 : f32 to vector<16x128xf32>
    %5 = arith.mulf %2, %4 : vector<16x128xf32>
    %c0_3 = arith.constant 0 : index
    %c0_4 = arith.constant 0 : index
    %c0_5 = arith.constant 0 : index
    %6 = vector.load %arg3[%c0_3, %c0_4, %c0_5] : memref<1x16x128xbf16, #tpu.memory_space<vmem>>, vector<1x16x128xbf16>
    %7 = vector.shape_cast %6 : vector<1x16x128xbf16> to vector<16x128xbf16>
    %8 = arith.extf %7 : vector<16x128xbf16> to vector<16x128xf32>
    %c1 = arith.constant 1 : index
    %9 = memref.load %arg1[%c1] : memref<2xf32, #tpu.memory_space<smem>>
    %10 = vector.broadcast %9 : f32 to vector<16x128xf32>
    %11 = arith.mulf %8, %10 : vector<16x128xf32>
    %12 = arith.addf %5, %11 : vector<16x128xf32>
    %13 = tpu.iota {dimensions = array<i32: 0>} : vector<16x128xi32>
    %14 = tpu.iota {dimensions = array<i32: 1>} : vector<16x128xi32>
    %cst = arith.constant 0.000000e+00 : f32
    %15 = vector.broadcast %cst : f32 to vector<16x128xf32>
    %c0_6 = arith.constant 0 : index
    %c0_7 = arith.constant 0 : index
    %16 = vector.load %arg4[%c0_6, %c0_7] : memref<9x128xf32, #tpu.memory_space<vmem>>, vector<9x128xf32>
    %c1_i32 = arith.constant 1 : i32
    %17 = tpu.dynamic_rotate %12 by %c1_i32 dim 0 : vector<16x128xf32>, i32 -> vector<16x128xf32>
    %c1_i32_8 = arith.constant 1 : i32
    %18 = vector.broadcast %c1_i32_8 : i32 to vector<16x128xi32>
    %19 = arith.cmpi sge, %13, %18 : vector<16x128xi32>
    %20 = arith.select %19, %17, %15 : vector<16x128xi1>, vector<16x128xf32>
    %c8_i32 = arith.constant 8 : i32
    %21 = tpu.dynamic_rotate %20 by %c8_i32 dim 1 : vector<16x128xf32>, i32 -> vector<16x128xf32>
    %c8_i32_9 = arith.constant 8 : i32
    %22 = vector.broadcast %c8_i32_9 : i32 to vector<16x128xi32>
    %23 = arith.cmpi sge, %14, %22 : vector<16x128xi32>
    %24 = arith.select %23, %21, %15 : vector<16x128xi1>, vector<16x128xf32>
    %25 = vector.extract_strided_slice %16 {offsets = [0, 0], sizes = [1, 128], strides = [1, 1]} : vector<9x128xf32> to vector<1x128xf32>
    %26 = vector.broadcast %25 : vector<1x128xf32> to vector<16x128xf32>
    %27 = arith.mulf %24, %26 : vector<16x128xf32>
    %28 = arith.addf %15, %27 : vector<16x128xf32>
    %29 = vector.extract_strided_slice %16 {offsets = [1, 0], sizes = [1, 128], strides = [1, 1]} : vector<9x128xf32> to vector<1x128xf32>
    %30 = vector.broadcast %29 : vector<1x128xf32> to vector<16x128xf32>
    %31 = arith.mulf %20, %30 : vector<16x128xf32>
    %32 = arith.addf %28, %31 : vector<16x128xf32>
    %c120_i32 = arith.constant 120 : i32
    %33 = tpu.dynamic_rotate %20 by %c120_i32 dim 1 : vector<16x128xf32>, i32 -> vector<16x128xf32>
    %c120_i32_10 = arith.constant 120 : i32
    %34 = vector.broadcast %c120_i32_10 : i32 to vector<16x128xi32>
    %35 = arith.cmpi slt, %14, %34 : vector<16x128xi32>
    %36 = arith.select %35, %33, %15 : vector<16x128xi1>, vector<16x128xf32>
    %37 = vector.extract_strided_slice %16 {offsets = [2, 0], sizes = [1, 128], strides = [1, 1]} : vector<9x128xf32> to vector<1x128xf32>
    %38 = vector.broadcast %37 : vector<1x128xf32> to vector<16x128xf32>
    %39 = arith.mulf %36, %38 : vector<16x128xf32>
    %40 = arith.addf %32, %39 : vector<16x128xf32>
    %c8_i32_11 = arith.constant 8 : i32
    %41 = tpu.dynamic_rotate %12 by %c8_i32_11 dim 1 : vector<16x128xf32>, i32 -> vector<16x128xf32>
    %c8_i32_12 = arith.constant 8 : i32
    %42 = vector.broadcast %c8_i32_12 : i32 to vector<16x128xi32>
    %43 = arith.cmpi sge, %14, %42 : vector<16x128xi32>
    %44 = arith.select %43, %41, %15 : vector<16x128xi1>, vector<16x128xf32>
    %45 = vector.extract_strided_slice %16 {offsets = [3, 0], sizes = [1, 128], strides = [1, 1]} : vector<9x128xf32> to vector<1x128xf32>
    %46 = vector.broadcast %45 : vector<1x128xf32> to vector<16x128xf32>
    %47 = arith.mulf %44, %46 : vector<16x128xf32>
    %48 = arith.addf %40, %47 : vector<16x128xf32>
    %49 = vector.extract_strided_slice %16 {offsets = [4, 0], sizes = [1, 128], strides = [1, 1]} : vector<9x128xf32> to vector<1x128xf32>
    %50 = vector.broadcast %49 : vector<1x128xf32> to vector<16x128xf32>
    %51 = arith.mulf %12, %50 : vector<16x128xf32>
    %52 = arith.addf %48, %51 : vector<16x128xf32>
    %c120_i32_13 = arith.constant 120 : i32
    %53 = tpu.dynamic_rotate %12 by %c120_i32_13 dim 1 : vector<16x128xf32>, i32 -> vector<16x128xf32>
    %c120_i32_14 = arith.constant 120 : i32
    %54 = vector.broadcast %c120_i32_14 : i32 to vector<16x128xi32>
    %55 = arith.cmpi slt, %14, %54 : vector<16x128xi32>
    %56 = arith.select %55, %53, %15 : vector<16x128xi1>, vector<16x128xf32>
    %57 = vector.extract_strided_slice %16 {offsets = [5, 0], sizes = [1, 128], strides = [1, 1]} : vector<9x128xf32> to vector<1x128xf32>
    %58 = vector.broadcast %57 : vector<1x128xf32> to vector<16x128xf32>
    %59 = arith.mulf %56, %58 : vector<16x128xf32>
    %60 = arith.addf %52, %59 : vector<16x128xf32>
    %c15_i32 = arith.constant 15 : i32
    %61 = tpu.dynamic_rotate %12 by %c15_i32 dim 0 : vector<16x128xf32>, i32 -> vector<16x128xf32>
    %c15_i32_15 = arith.constant 15 : i32
    %62 = vector.broadcast %c15_i32_15 : i32 to vector<16x128xi32>
    %63 = arith.cmpi slt, %13, %62 : vector<16x128xi32>
    %64 = arith.select %63, %61, %15 : vector<16x128xi1>, vector<16x128xf32>
    %c8_i32_16 = arith.constant 8 : i32
    %65 = tpu.dynamic_rotate %64 by %c8_i32_16 dim 1 : vector<16x128xf32>, i32 -> vector<16x128xf32>
    %c8_i32_17 = arith.constant 8 : i32
    %66 = vector.broadcast %c8_i32_17 : i32 to vector<16x128xi32>
    %67 = arith.cmpi sge, %14, %66 : vector<16x128xi32>
    %68 = arith.select %67, %65, %15 : vector<16x128xi1>, vector<16x128xf32>
    %69 = vector.extract_strided_slice %16 {offsets = [6, 0], sizes = [1, 128], strides = [1, 1]} : vector<9x128xf32> to vector<1x128xf32>
    %70 = vector.broadcast %69 : vector<1x128xf32> to vector<16x128xf32>
    %71 = arith.mulf %68, %70 : vector<16x128xf32>
    %72 = arith.addf %60, %71 : vector<16x128xf32>
    %73 = vector.extract_strided_slice %16 {offsets = [7, 0], sizes = [1, 128], strides = [1, 1]} : vector<9x128xf32> to vector<1x128xf32>
    %74 = vector.broadcast %73 : vector<1x128xf32> to vector<16x128xf32>
    %75 = arith.mulf %64, %74 : vector<16x128xf32>
    %76 = arith.addf %72, %75 : vector<16x128xf32>
    %c120_i32_18 = arith.constant 120 : i32
    %77 = tpu.dynamic_rotate %64 by %c120_i32_18 dim 1 : vector<16x128xf32>, i32 -> vector<16x128xf32>
    %c120_i32_19 = arith.constant 120 : i32
    %78 = vector.broadcast %c120_i32_19 : i32 to vector<16x128xi32>
    %79 = arith.cmpi slt, %14, %78 : vector<16x128xi32>
    %80 = arith.select %79, %77, %15 : vector<16x128xi1>, vector<16x128xf32>
    %81 = vector.extract_strided_slice %16 {offsets = [8, 0], sizes = [1, 128], strides = [1, 1]} : vector<9x128xf32> to vector<1x128xf32>
    %82 = vector.broadcast %81 : vector<1x128xf32> to vector<16x128xf32>
    %83 = arith.mulf %80, %82 : vector<16x128xf32>
    %84 = arith.addf %76, %83 : vector<16x128xf32>
    %85 = arith.truncf %84 : vector<16x128xf32> to vector<16x128xbf16>
    %c0_20 = arith.constant 0 : index
    %c0_21 = arith.constant 0 : index
    %86 = vector.load %arg5[%c0_20, %c0_21] : memref<128x128xbf16, #tpu.memory_space<vmem>>, vector<128x128xbf16>
    %cst_22 = arith.constant dense<0.000000e+00> : vector<16x128xf32>
    %87 = tpu.matmul %85, %86, %cst_22 {dimension_numbers = #tpu.dot_dimension_numbers<[1], [0], [0], [1], [0, 0, 1, 1], [], []>} : vector<16x128xbf16>, vector<128x128xbf16>, vector<16x128xf32> -> vector<16x128xf32>
    %c0_23 = arith.constant 0 : index
    %c0_24 = arith.constant 0 : index
    %88 = vector.load %arg6[%c0_23, %c0_24] : memref<1x128xf32, #tpu.memory_space<vmem>>, vector<1x128xf32>
    %89 = vector.broadcast %88 : vector<1x128xf32> to vector<16x128xf32>
    %90 = arith.mulf %87, %89 : vector<16x128xf32>
    %c0_25 = arith.constant 0 : index
    %c0_26 = arith.constant 0 : index
    %91 = vector.load %arg7[%c0_25, %c0_26] : memref<1x128xf32, #tpu.memory_space<vmem>>, vector<1x128xf32>
    %92 = vector.broadcast %91 : vector<1x128xf32> to vector<16x128xf32>
    %93 = arith.addf %90, %92 : vector<16x128xf32>
    %94 = arith.negf %93 : vector<16x128xf32>
    %95 = math.exp %94 : vector<16x128xf32>
    %cst_27 = arith.constant 1.000000e+00 : f32
    %96 = vector.broadcast %cst_27 : f32 to vector<16x128xf32>
    %97 = arith.addf %96, %95 : vector<16x128xf32>
    %98 = arith.divf %96, %97 : vector<16x128xf32>
    %99 = arith.mulf %93, %98 : vector<16x128xf32>
    %c0_28 = arith.constant 0 : index
    %c0_29 = arith.constant 0 : index
    %c0_30 = arith.constant 0 : index
    %100 = vector.load %arg8[%c0_28, %c0_29, %c0_30] : memref<1x16x128xf32, #tpu.memory_space<vmem>>, vector<1x16x128xf32>
    %101 = vector.shape_cast %100 : vector<1x16x128xf32> to vector<16x128xf32>
    %102 = vector.shape_cast %99 : vector<16x128xf32> to vector<1x16x128xf32>
    tpu.vector_store %arg8[%c0_28, %c0_29, %c0_30], %102 {strides = array<i32>} : memref<1x16x128xf32, #tpu.memory_space<vmem>>, vector<1x16x128xf32>,
    return
  }
  func.func @transform_0(%arg0: i32) -> i32 {
    %c0_i32 = arith.constant 0 : i32
    %c0_i32_0 = arith.constant 0 : i32
    return %c0_i32 : i32
  }
  func.func @transform_1(%arg0: i32) -> (i32, i32, i32) {
    %c0_i32 = arith.constant 0 : i32
    %c0_i32_0 = arith.constant 0 : i32
    %c0_i32_1 = arith.constant 0 : i32
    return %arg0, %c0_i32, %c0_i32_0 : i32, i32, i32
  }
  func.func @transform_2(%arg0: i32) -> (i32, i32, i32) {
    %c0_i32 = arith.constant 0 : i32
    %c0_i32_0 = arith.constant 0 : i32
    %c0_i32_1 = arith.constant 0 : i32
    return %arg0, %c0_i32, %c0_i32_0 : i32, i32, i32
  }
  func.func @transform_3(%arg0: i32) -> (i32, i32) {
    %c0_i32 = arith.constant 0 : i32
    %c0_i32_0 = arith.constant 0 : i32
    %c0_i32_1 = arith.constant 0 : i32
    return %c0_i32, %c0_i32_0 : i32, i32
  }
  func.func @transform_4(%arg0: i32) -> (i32, i32) {
    %c0_i32 = arith.constant 0 : i32
    %c0_i32_0 = arith.constant 0 : i32
    %c0_i32_1 = arith.constant 0 : i32
    return %c0_i32, %c0_i32_0 : i32, i32
  }
  func.func @transform_5(%arg0: i32) -> (i32, i32) {
    %c0_i32 = arith.constant 0 : i32
    %c0_i32_0 = arith.constant 0 : i32
    %c0_i32_1 = arith.constant 0 : i32
    return %c0_i32, %c0_i32_0 : i32, i32
  }
  func.func @transform_6(%arg0: i32) -> (i32, i32) {
    %c0_i32 = arith.constant 0 : i32
    %c0_i32_0 = arith.constant 0 : i32
    %c0_i32_1 = arith.constant 0 : i32
    return %c0_i32, %c0_i32_0 : i32, i32
  }
  func.func @transform_7(%arg0: i32) -> (i32, i32, i32) {
    %c0_i32 = arith.constant 0 : i32
    %c0_i32_0 = arith.constant 0 : i32
    %c0_i32_1 = arith.constant 0 : i32
    return %arg0, %c0_i32, %c0_i32_0 : i32, i32, i32
  }
}

</mosaic_0001>

<llo_original>
// kernel: tpu_custom_call.1
$region0: #{tpu_custom_call.1}
  #allocation0 [shape = 'u32[]', space=smem, size = 0x4, offset = 0x4, fixed_abs, tag = 'smem constant byte address 0x4 - core index']
  #allocation1 [shape = 'u32[144,128]{1,0:T(1,128)}', space=vmem, size = 0x12000, scoped, tag = 'internal scratch']
  %s0 = inlined_call_operand.hbm [shape: f32[2], index: 0, kind: input, shape index: {}]
  %s1 = inlined_call_operand.hbm [shape: bf16[2,16,128], index: 1, kind: input, shape index: {}]
  %s2 = inlined_call_operand.hbm [shape: bf16[2,16,128], index: 2, kind: input, shape index: {}]
  %s3 = inlined_call_operand.hbm [shape: f32[9,128], index: 3, kind: input, shape index: {}]
  %s4 = inlined_call_operand.hbm [shape: bf16[128,128], index: 4, kind: input, shape index: {}]
  %s5 = inlined_call_operand.vmem [shape: f32[1,128], index: 5, kind: input, shape index: {}]
  %s6 = inlined_call_operand.vmem [shape: f32[1,128], index: 6, kind: input, shape index: {}]
  %s7 = inlined_call_operand.hbm [shape: f32[2,16,128], index: 7, kind: output, shape index: {}]
  %s8 = sld [smem:[#allocation0]]
  $region81: #{tpu_custom_call.1} parent=0
    _
  %s10 = ssub.s32 1, %s8
  %s11 = scalar_select 0, %s10, %s8
  $region1: #{tpu_custom_call.1} parent=0
    #allocation2 [shape = 'u8[512]{0}', space=smem, size = 0x200, scoped, tag = 'input window, operand 0, single buffered']
    #allocation3 [shape = 's32[2]{0}', space=sflag, size = 0x8, scoped, tag = 'scoped memory for tpu_custom_call.1']
    #allocation4 [shape = 's32[2]{0}', space=sflag, size = 0x8, scoped, tag = 'scoped memory for tpu_custom_call.1']
    #allocation5 [shape = 's32[2]{0}', space=sflag, size = 0x8, scoped, tag = 'scoped memory for tpu_custom_call.1']
    #allocation6 [shape = 'u8[8192]{0}', space=vmem, size = 0x2000, scoped, tag = 'input window, operand 1']
    #allocation7 [shape = 'u8[8192]{0}', space=vmem, size = 0x2000, scoped, tag = 'input window, operand 2']
    #allocation8 [shape = 's32[2]{0}', space=sflag, size = 0x8, scoped, tag = 'scoped memory for tpu_custom_call.1']
    #allocation9 [shape = 'u8[8192]{0}', space=vmem, size = 0x2000, scoped, tag = 'input window, operand 3, single buffered']
    #allocation10 [shape = 'u8[32768]{0}', space=vmem, size = 0x8000, scoped, tag = 'input window, operand 4, single buffered']
    #allocation11 [shape = 's32[1]{0}', space=sflag, size = 0x4, scoped, tag = 'scoped memory for tpu_custom_call.1']
    #allocation12 [shape = 'u8[16384]{0}', space=vmem, size = 0x4000, scoped, tag = 'output window, operand 0']
    %12 = vsyncpa [#allocation5], 0
    %13 = vsyncpa [#allocation3], 0
    %s14 = scalar_lea.sflag [#allocation3], 1
    %15 = vsyncpa %s14, 0
    %16 = vsyncpa [#allocation8], 0
    %s17 = scalar_lea.sflag [#allocation8], 1
    %18 = vsyncpa %s17, 0
    %19 = vsyncpa [#allocation11], 0
    %20 = vsyncpa [#allocation4], 0
    %s21 = scalar_lea.sflag [#allocation4], 1
    %22 = vsyncpa %s21, 0
    loop: start=0, step=1, limit=4
    $region2: #{tpu_custom_call.1} parent=1 // loop_pre_header
      _
    $region3: #{tpu_custom_call.1} parent=1 // loop_header
      %s24 = sphi 0, %s28
      %p25 = scmp.ge.s32.totalorder %s24, 4
      %s32 = sphi 0, %s32
      %s34 = sphi 0, %s32
      %s35 = sphi 0, %s34
      %s49 = sphi 0, %s35
      %s55 = sphi 0, %s57
      %s58 = sphi 0, %s55
      %s59 = sphi 0, %s58
      %s75 = sphi 0, %s59
      %s81 = sphi 0, %s83
      %s84 = sphi 0, %s81
      %s85 = sphi 0, %s84
      %s101 = sphi 0, %s85
      %s105 = sphi 0, %s105
      %s107 = sphi 0, %s105
      %s108 = sphi 0, %s107
      %s122 = sphi 0, %s108
      %s126 = sphi 0, %s126
      %s128 = sphi 0, %s126
      %s129 = sphi 0, %s128
      %s143 = sphi 0, %s129
      %s147 = sphi 0, %s147
      %s149 = sphi 0, %s147
      %s150 = sphi 0, %s149
      %s164 = sphi 0, %s150
      %s168 = sphi 0, %s168
      %s170 = sphi 0, %s168
      %s171 = sphi 0, %s170
      %s185 = sphi 0, %s171
      %s191 = sphi 0, %s193
      %s194 = sphi 0, %s191
      %s195 = sphi 0, %s194
      %s211 = sphi 0, %s195
    $region4: #{tpu_custom_call.1} parent=1 // loop_header_branch
      %27 = sbr.rel (%p25) target = $region8
    $region5: #{tpu_custom_call.1} parent=1 // loop_body
      %s29 = ssub.s32 %s24, 1
      %s30 = ssub.s32 %s24, 2
      %s31 = sadd.s32 %s24, 1
      %s33 = sadd.s32 %s32, 1
      %p36 = scmp.eq.s32.totalorder %s24, 1
      %p37 = scmp.ne.s32.totalorder %s32, %s34
      %p38 = scmp.eq.s32.totalorder %s24, 0
      %p39 = por %p37, %p38
      %p40 = scmp.ne.s32.totalorder %s32, %s34
      %p41 = scmp.eq.s32.totalorder %s29, 1
      %p42 = por %p40, %p41
      %p43 = scmp.ne.s32.totalorder %s34, %s35
      %p44 = scmp.eq.s32.totalorder %s29, 0
      %p45 = por %p43, %p44
      %p46 = scmp.ne.s32.totalorder %s34, %s35
      %p47 = scmp.eq.s32.totalorder %s30, 1
      %p48 = por %p46, %p47
      %p50 = scmp.ne.s32.totalorder %s35, %s49
      %p51 = scmp.eq.s32.totalorder %s30, 0
      %p52 = por %p50, %p51
      %s53 = ssub.s32 %s24, %s31
      %p54 = scmp.eq.s32.totalorder %s53, 0
      %s56 = sadd.s32 %s55, 1
      %s57 = scalar_select %p54, %s55, %s56
      %p60 = pneg %p54
      %p61 = scmp.eq.s32.totalorder %s24, 1
      %p62 = por %p60, %p61
      %p63 = scmp.ne.s32.totalorder %s55, %s58
      %p64 = scmp.eq.s32.totalorder %s24, 0
      %p65 = por %p63, %p64
      %p66 = scmp.ne.s32.totalorder %s55, %s58
      %p67 = scmp.eq.s32.totalorder %s29, 1
      %p68 = por %p66, %p67
      %p69 = scmp.ne.s32.totalorder %s58, %s59
      %p70 = scmp.eq.s32.totalorder %s29, 0
      %p71 = por %p69, %p70
      %p72 = scmp.ne.s32.totalorder %s58, %s59
      %p73 = scmp.eq.s32.totalorder %s30, 1
      %p74 = por %p72, %p73
      %p76 = scmp.ne.s32.totalorder %s59, %s75
      %p77 = scmp.eq.s32.totalorder %s30, 0
      %p78 = por %p76, %p77
      %s79 = ssub.s32 %s24, %s31
      %p80 = scmp.eq.s32.totalorder %s79, 0
      %s82 = sadd.s32 %s81, 1
      %s83 = scalar_select %p80, %s81, %s82
      %p86 = pneg %p80
      %p87 = scmp.eq.s32.totalorder %s24, 1
      %p88 = por %p86, %p87
      %p89 = scmp.ne.s32.totalorder %s81, %s84
      %p90 = scmp.eq.s32.totalorder %s24, 0
      %p91 = por %p89, %p90
      %p92 = scmp.ne.s32.totalorder %s81, %s84
      %p93 = scmp.eq.s32.totalorder %s29, 1
      %p94 = por %p92, %p93
      %p95 = scmp.ne.s32.totalorder %s84, %s85
      %p96 = scmp.eq.s32.totalorder %s29, 0
      %p97 = por %p95, %p96
      %p98 = scmp.ne.s32.totalorder %s84, %s85
      %p99 = scmp.eq.s32.totalorder %s30, 1
      %p100 = por %p98, %p99
      %p102 = scmp.ne.s32.totalorder %s85, %s101
      %p103 = scmp.eq.s32.totalorder %s30, 0
      %p104 = por %p102, %p103
      %s106 = sadd.s32 %s105, 1
      %p109 = scmp.eq.s32.totalorder %s24, 1
      %p110 = scmp.ne.s32.totalorder %s105, %s107
      %p111 = scmp.eq.s32.totalorder %s24, 0
      %p112 = por %p110, %p111
      %p113 = scmp.ne.s32.totalorder %s105, %s107
      %p114 = scmp.eq.s32.totalorder %s29, 1
      %p115 = por %p113, %p114
      %p116 = scmp.ne.s32.totalorder %s107, %s108
      %p117 = scmp.eq.s32.totalorder %s29, 0
      %p118 = por %p116, %p117
      %p119 = scmp.ne.s32.totalorder %s107, %s108
      %p120 = scmp.eq.s32.totalorder %s30, 1
      %p121 = por %p119, %p120
      %p123 = scmp.ne.s32.totalorder %s108, %s122
      %p124 = scmp.eq.s32.totalorder %s30, 0
      %p125 = por %p123, %p124
      %s127 = sadd.s32 %s126, 1
      %p130 = scmp.eq.s32.totalorder %s24, 1
      %p131 = scmp.ne.s32.totalorder %s126, %s128
      %p132 = scmp.eq.s32.totalorder %s24, 0
      %p133 = por %p131, %p132
      %p134 = scmp.ne.s32.totalorder %s126, %s128
      %p135 = scmp.eq.s32.totalorder %s29, 1
      %p136 = por %p134, %p135
      %p137 = scmp.ne.s32.totalorder %s128, %s129
      %p138 = scmp.eq.s32.totalorder %s29, 0
      %p139 = por %p137, %p138
      %p140 = scmp.ne.s32.totalorder %s128, %s129
      %p141 = scmp.eq.s32.totalorder %s30, 1
      %p142 = por %p140, %p141
      %p144 = scmp.ne.s32.totalorder %s129, %s143
      %p145 = scmp.eq.s32.totalorder %s30, 0
      %p146 = por %p144, %p145
      %s148 = sadd.s32 %s147, 1
      %p151 = scmp.eq.s32.totalorder %s24, 1
      %p152 = scmp.ne.s32.totalorder %s147, %s149
      %p153 = scmp.eq.s32.totalorder %s24, 0
      %p154 = por %p152, %p153
      %p155 = scmp.ne.s32.totalorder %s147, %s149
      %p156 = scmp.eq.s32.totalorder %s29, 1
      %p157 = por %p155, %p156
      %p158 = scmp.ne.s32.totalorder %s149, %s150
      %p159 = scmp.eq.s32.totalorder %s29, 0
      %p160 = por %p158, %p159
      %p161 = scmp.ne.s32.totalorder %s149, %s150
      %p162 = scmp.eq.s32.totalorder %s30, 1
      %p163 = por %p161, %p162
      %p165 = scmp.ne.s32.totalorder %s150, %s164
      %p166 = scmp.eq.s32.totalorder %s30, 0
      %p167 = por %p165, %p166
      %s169 = sadd.s32 %s168, 1
      %p172 = scmp.eq.s32.totalorder %s24, 1
      %p173 = scmp.ne.s32.totalorder %s168, %s170
      %p174 = scmp.eq.s32.totalorder %s24, 0
      %p175 = por %p173, %p174
      %p176 = scmp.ne.s32.totalorder %s168, %s170
      %p177 = scmp.eq.s32.totalorder %s29, 1
      %p178 = por %p176, %p177
      %p179 = scmp.ne.s32.totalorder %s170, %s171
      %p180 = scmp.eq.s32.totalorder %s29, 0
      %p181 = por %p179, %p180
      %p182 = scmp.ne.s32.totalorder %s170, %s171
      %p183 = scmp.eq.s32.totalorder %s30, 1
      %p184 = por %p182, %p183
      %p186 = scmp.ne.s32.totalorder %s171, %s185
      %p187 = scmp.eq.s32.totalorder %s30, 0
      %p188 = por %p186, %p187
      %s189 = ssub.s32 %s24, %s31
      %p190 = scmp.eq.s32.totalorder %s189, 0
      %s192 = sadd.s32 %s191, 1
      %s193 = scalar_select %p190, %s191, %s192
      %p196 = pneg %p190
      %p197 = scmp.eq.s32.totalorder %s24, 1
      %p198 = por %p196, %p197
      %p199 = scmp.ne.s32.totalorder %s191, %s194
      %p200 = scmp.eq.s32.totalorder %s24, 0
      %p201 = por %p199, %p200
      %p202 = scmp.ne.s32.totalorder %s191, %s194
      %p203 = scmp.eq.s32.totalorder %s29, 1
      %p204 = por %p202, %p203
      %p205 = scmp.ne.s32.totalorder %s194, %s195
      %p206 = scmp.eq.s32.totalorder %s29, 0
      %p207 = por %p205, %p206
      %p208 = scmp.ne.s32.totalorder %s194, %s195
      %p209 = scmp.eq.s32.totalorder %s30, 1
      %p210 = por %p208, %p209
      %p212 = scmp.ne.s32.totalorder %s195, %s211
      %p213 = scmp.eq.s32.totalorder %s30, 0
      %p214 = por %p212, %p213
      %p215 = scmp.le.s32.totalorder 1, %s24
      %p216 = scmp.lt.s32.totalorder %s24, 3
      %p217 = pnand %p215, %p216
      %p218 = pneg %p217
      // Predicated region
      $region9: #{tpu_custom_call.1} parent=5 // pred_check
        _
      $region10: #{tpu_custom_call.1} parent=5 // pred_check_branch
        %220 = sbr.rel (%p217) target = $region12
      $region11: #{tpu_custom_call.1} parent=5 // pred_region
        %s221 = ssub.s32 %s24, 1
        // Predicated region
        $region13: #{tpu_custom_call.1} parent=11 // pred_check
          %p222 = pneg %p45
        $region14: #{tpu_custom_call.1} parent=11 // pred_check_branch
          %224 = sbr.rel (%p222) target = $region16
        $region15: #{tpu_custom_call.1} parent=11 // pred_region
          %s226 = ssub.s32 16, 16
          %227 = vsyncadd [#allocation5], %s226
          %230 = dma.hbm_to_smem %s0, 16, [#allocation2], [#allocation5]
        $region16: #{tpu_custom_call.1} parent=11 // pred_fallthru
          _
        // Predicated region
        $region17: #{tpu_custom_call.1} parent=11 // pred_check
          %p231 = pneg %p118
        $region18: #{tpu_custom_call.1} parent=11 // pred_check_branch
          %233 = sbr.rel (%p231) target = $region20
        $region19: #{tpu_custom_call.1} parent=11 // pred_region
          %s235 = ssub.s32 256, 256
          %236 = vsyncadd [#allocation8], %s235
          %s237 = sshll.u32 [#allocation9], 4
          %s238 = int_to_ptr.vmem [resolvable:$true] %s237
          %243 = dma.hbm_to_vmem [thread:$0]  %s3, 256, %s238, [#allocation8], 128, 128, 8
        $region20: #{tpu_custom_call.1} parent=11 // pred_fallthru
          _
        // Predicated region
        $region21: #{tpu_custom_call.1} parent=11 // pred_check
          %p244 = pneg %p139
        $region22: #{tpu_custom_call.1} parent=11 // pred_check_branch
          %246 = sbr.rel (%p244) target = $region24
        $region23: #{tpu_custom_call.1} parent=11 // pred_region
          %s248 = ssub.s32 1024, 1024
          %249 = vsyncadd [#allocation11], %s248
          %s250 = sshll.u32 [#allocation10], 4
          %s251 = int_to_ptr.vmem [resolvable:$true] %s250
          %256 = dma.hbm_to_vmem [thread:$0]  %s4, 1024, %s251, [#allocation11], 64, 64, 4
        $region24: #{tpu_custom_call.1} parent=11 // pred_fallthru
          _
        // Predicated region
        $region25: #{tpu_custom_call.1} parent=11 // pred_check
          %p257 = pneg %p160
        $region26: #{tpu_custom_call.1} parent=11 // pred_check_branch
          %259 = sbr.rel (%p257) target = $region28
        $region27: #{tpu_custom_call.1} parent=11 // pred_region
          _
        $region28: #{tpu_custom_call.1} parent=11 // pred_fallthru
          _
        // Predicated region
        $region29: #{tpu_custom_call.1} parent=11 // pred_check
          %p260 = pneg %p181
        $region30: #{tpu_custom_call.1} parent=11 // pred_check_branch
          %262 = sbr.rel (%p260) target = $region32
        $region31: #{tpu_custom_call.1} parent=11 // pred_region
          _
        $region32: #{tpu_custom_call.1} parent=11 // pred_fallthru
          _
      $region12: #{tpu_custom_call.1} parent=5 // pred_fallthru
        _
      %p263 = scmp.lt.s32.totalorder %s24, 2
      // Predicated region
      $region33: #{tpu_custom_call.1} parent=5 // pred_check
        %p264 = pneg %p263
      $region34: #{tpu_custom_call.1} parent=5 // pred_check_branch
        %266 = sbr.rel (%p264) target = $region36
      $region35: #{tpu_custom_call.1} parent=5 // pred_region
        // Predicated region
        $region37: #{tpu_custom_call.1} parent=35 // pred_check
          %p267 = pneg %p65
        $region38: #{tpu_custom_call.1} parent=35 // pred_check_branch
          %269 = sbr.rel (%p267) target = $region40
        $region39: #{tpu_custom_call.1} parent=35 // pred_region
          %s270 = sand.u32 %s55, 1
          %s271 = scalar_lea.sflag [#allocation3], %s270
          %s272 = sand.u32 %s55, 1
          %s273 = smul.addr %s272, 8
          %s274 = scalar_lea.vmem [#allocation6], %s273
          %s276 = ssub.s32 128, 128
          %277 = vsyncadd %s271, %s276
          %s278 = smul.addr %s24, 2
          %s279 = smul.addr %s278, 64
          %s280 = scalar_lea.hbm %s1, %s279
          %s281 = sshll.u32 %s274, 4
          %s282 = int_to_ptr.vmem [resolvable:$true] %s281
          %287 = dma.hbm_to_vmem [thread:$0]  %s280, 128, %s282, %s271, 64, 64, 4
        $region40: #{tpu_custom_call.1} parent=35 // pred_fallthru
          _
        // Predicated region
        $region41: #{tpu_custom_call.1} parent=35 // pred_check
          %p288 = pneg %p91
        $region42: #{tpu_custom_call.1} parent=35 // pred_check_branch
          %290 = sbr.rel (%p288) target = $region44
        $region43: #{tpu_custom_call.1} parent=35 // pred_region
          %s291 = sand.u32 %s24, 1
          %s292 = scalar_lea.sflag [#allocation8], %s291
          %s293 = sand.u32 %s81, 1
          %s294 = smul.addr %s293, 8
          %s295 = scalar_lea.vmem [#allocation7], %s294
          %s297 = ssub.s32 128, 128
          %298 = vsyncadd %s292, %s297
          %s299 = smul.addr %s24, 2
          %s300 = smul.addr %s299, 64
          %s301 = scalar_lea.hbm %s2, %s300
          %s302 = sshll.u32 %s295, 4
          %s303 = int_to_ptr.vmem [resolvable:$true] %s302
          %308 = dma.hbm_to_vmem [thread:$0]  %s301, 128, %s303, %s292, 64, 64, 4
        $region44: #{tpu_custom_call.1} parent=35 // pred_fallthru
          _
      $region36: #{tpu_custom_call.1} parent=5 // pred_fallthru
        _
      %p309 = scmp.le.s32.totalorder 1, %s24
      %p310 = scmp.lt.s32.totalorder %s24, 3
      %p311 = pnand %p309, %p310
      %p312 = pneg %p311
      // Predicated region
      $region45: #{tpu_custom_call.1} parent=5 // pred_check
        _
      $region46: #{tpu_custom_call.1} parent=5 // pred_check_branch
        %314 = sbr.rel (%p311) target = $region48
      $region47: #{tpu_custom_call.1} parent=5 // pred_region
        %s315 = ssub.s32 %s24, 1
        // Predicated region
        $region49: #{tpu_custom_call.1} parent=47 // pred_check
          %p316 = pneg %p45
        $region50: #{tpu_custom_call.1} parent=47 // pred_check_branch
          %318 = sbr.rel (%p316) target = $region52
        $region51: #{tpu_custom_call.1} parent=47 // pred_region
          %319 = dma.done [#allocation5], 16
        $region52: #{tpu_custom_call.1} parent=47 // pred_fallthru
          _
        %s320 = sand.u32 %s58, 1
        %s321 = scalar_lea.sflag [#allocation3], %s320
        %s322 = sand.u32 %s58, 1
        %s323 = smul.addr %s322, 8
        %s324 = scalar_lea.vmem [#allocation6], %s323
        // Predicated region
        $region53: #{tpu_custom_call.1} parent=47 // pred_check
          %p325 = pneg %p71
        $region54: #{tpu_custom_call.1} parent=47 // pred_check_branch
          %327 = sbr.rel (%p325) target = $region56
        $region55: #{tpu_custom_call.1} parent=47 // pred_region
          %328 = dma.done %s321, 128
        $region56: #{tpu_custom_call.1} parent=47 // pred_fallthru
          _
        %s329 = sand.u32 %s29, 1
        %s330 = scalar_lea.sflag [#allocation8], %s329
        %s331 = sand.u32 %s84, 1
        %s332 = smul.addr %s331, 8
        %s333 = scalar_lea.vmem [#allocation7], %s332
        // Predicated region
        $region57: #{tpu_custom_call.1} parent=47 // pred_check
          %p334 = pneg %p97
        $region58: #{tpu_custom_call.1} parent=47 // pred_check_branch
          %336 = sbr.rel (%p334) target = $region60
        $region59: #{tpu_custom_call.1} parent=47 // pred_region
          %337 = dma.done %s330, 128
        $region60: #{tpu_custom_call.1} parent=47 // pred_fallthru
          _
        // Predicated region
        $region61: #{tpu_custom_call.1} parent=47 // pred_check
          %p338 = pneg %p118
        $region62: #{tpu_custom_call.1} parent=47 // pred_check_branch
          %340 = sbr.rel (%p338) target = $region64
        $region63: #{tpu_custom_call.1} parent=47 // pred_region
          %341 = dma.done [#allocation8], 256
        $region64: #{tpu_custom_call.1} parent=47 // pred_fallthru
          _
        // Predicated region
        $region65: #{tpu_custom_call.1} parent=47 // pred_check
          %p342 = pneg %p139
        $region66: #{tpu_custom_call.1} parent=47 // pred_check_branch
          %344 = sbr.rel (%p342) target = $region68
        $region67: #{tpu_custom_call.1} parent=47 // pred_region
          %345 = dma.done [#allocation11], 1024
        $region68: #{tpu_custom_call.1} parent=47 // pred_fallthru
          _
        %346 = sfence
        %p347 = pneg %p45
        %p348 = pneg %p42
        %s349 = sand.u32 %s58, 1
        %s350 = scalar_lea.sflag [#allocation3], %s349
        %s351 = sand.u32 %s58, 1
        %s352 = smul.addr %s351, 8
        %s353 = scalar_lea.vmem [#allocation6], %s352
        %p354 = pneg %p71
        %p355 = pneg %p68
        %s356 = sand.u32 %s29, 1
        %s357 = scalar_lea.sflag [#allocation8], %s356
        %s358 = sand.u32 %s84, 1
        %s359 = smul.addr %s358, 8
        %s360 = scalar_lea.vmem [#allocation7], %s359
        %p361 = pneg %p97
        %p362 = pneg %p94
        %p363 = pneg %p118
        %p364 = pneg %p115
        %p365 = pneg %p139
        %p366 = pneg %p136
        %p367 = pneg %p160
        %p368 = pneg %p157
        %p369 = pneg %p181
        %p370 = pneg %p178
        %p371 = pneg %p207
        %p372 = pneg %p204
        %s373 = sand.u32 %s194, 1
        %s374 = scalar_lea.sflag [#allocation4], %s373
        %s375 = sand.u32 %s194, 1
        %s376 = smul.addr %s375, 16
        %s377 = scalar_lea.vmem [#allocation12], %s376
        %v379 = vld [vmem:[%s324] sm:$0xf]
        %v380 = vld [vmem:[%s324 + $0x4] sm:$0xf]
        %v381 = vunpack.c.l.bf16 %v379
        %v382 = vunpack.c.l.bf16 %v380
        %s383 = sld [smem:[#allocation2]]
        %v384 = vstv %s383
        %v385 = vmul.f32 %v381, %v384
        %v386 = vmul.f32 %v382, %v384
        %v387 = vld [vmem:[%s333] sm:$0xf]
        %v388 = vld [vmem:[%s333 + $0x4] sm:$0xf]
        %v389 = vunpack.c.l.bf16 %v387
        %v390 = vunpack.c.l.bf16 %v388
        %s391 = sld [smem:[#allocation2 + $0x1]]
        %v392 = vstv %s391
        %v393 = vmul.f32 %v389, %v392
        %v394 = vmul.f32 %v390, %v392
        %v395 = vadd.f32 %v385, %v393
        %v396 = vadd.f32 %v386, %v394
        %v397 = vlaneseq
        %v398 = vshrl.u32 %v397, 7
        %v399 = vadd.s32 %v398, 8
        %v400 = vlaneseq
        %v401 = vand.u32 %v400, 127
        %v402 = vld [vmem:[#allocation9] sm:$0xff]
        %v403 = vld [vmem:[#allocation9 + $0x8] sm:$0x1]
        %v404 = vrot.slane %v395, 7
        %v405 = vrot.slane %v396, 7
        %vm406 = vcmp.lt.s32.totalorder %v398, 1
        %v407 = vsel %vm406, %v404, %v405
        %v408 = vsel %vm406, %v405, %v404
        %vm409 = vcmp.ge.s32.totalorder %v398, 1
        %vm410 = vcmp.ge.s32.totalorder %v399, 1
        %v411 = vsel %vm409, %v408, 0.0
        %v412 = vsel %vm410, %v407, 0.0
        %413 = vrot.lane.b32.xlu0 %v411, 8
        %v414 = vpop.permute.xlu0 %413
        %415 = vrot.lane.b32.xlu0 %v412, 8
        %v416 = vpop.permute.xlu0 %415
        %vm417 = vcmp.ge.s32.totalorder %v401, 8
        %v418 = vsel %vm417, %v414, 0.0
        %v419 = vsel %vm417, %v416, 0.0
        %v420 = vlaneseq
        %v421 = vshrl.u32 %v420, 7
        %v422 = vsub.s32 0, %v421
        %v423 = vrot.slane %v402, %v422
        %v424 = vmul.f32 %v418, %v423
        %v425 = vmul.f32 %v419, %v423
        %v426 = vadd.f32 %v424, 0.0
        %v427 = vadd.f32 %v425, 0.0
        %v428 = vlaneseq
        %v429 = vshrl.u32 %v428, 7
        %v430 = vsub.s32 1, %v429
        %v431 = vrot.slane %v402, %v430
        %v432 = vmul.f32 %v411, %v431
        %v433 = vmul.f32 %v412, %v431
        %v434 = vadd.f32 %v426, %v432
        %v435 = vadd.f32 %v427, %v433
        %436 = vrot.lane.b32.xlu0 %v411, 120
        %v437 = vpop.permute.xlu0 %436
        %438 = vrot.lane.b32.xlu0 %v412, 120
        %v439 = vpop.permute.xlu0 %438
        %vm440 = vcmp.lt.s32.totalorder %v401, 120
        %v441 = vsel %vm440, %v437, 0.0
        %v442 = vsel %vm440, %v439, 0.0
        %v443 = vlaneseq
        %v444 = vshrl.u32 %v443, 7
        %v445 = vsub.s32 2, %v444
        %v446 = vrot.slane %v402, %v445
        %v447 = vmul.f32 %v441, %v446
        %v448 = vmul.f32 %v442, %v446
        %v449 = vadd.f32 %v434, %v447
        %v450 = vadd.f32 %v435, %v448
        %451 = vrot.lane.b32.xlu0 %v395, 8
        %v452 = vpop.permute.xlu0 %451
        %453 = vrot.lane.b32.xlu0 %v396, 8
        %v454 = vpop.permute.xlu0 %453
        %v455 = vsel %vm417, %v452, 0.0
        %v456 = vsel %vm417, %v454, 0.0
        %v457 = vlaneseq
        %v458 = vshrl.u32 %v457, 7
        %v459 = vsub.s32 3, %v458
        %v460 = vrot.slane %v402, %v459
        %v461 = vmul.f32 %v455, %v460
        %v462 = vmul.f32 %v456, %v460
        %v463 = vadd.f32 %v449, %v461
        %v464 = vadd.f32 %v450, %v462
        %v465 = vlaneseq
        %v466 = vshrl.u32 %v465, 7
        %v467 = vsub.s32 4, %v466
        %v468 = vrot.slane %v402, %v467
        %v469 = vmul.f32 %v395, %v468
        %v470 = vmul.f32 %v396, %v468
        %v471 = vadd.f32 %v463, %v469
        %v472 = vadd.f32 %v464, %v470
        %473 = vrot.lane.b32.xlu0 %v395, 120
        %v474 = vpop.permute.xlu0 %473
        %475 = vrot.lane.b32.xlu0 %v396, 120
        %v476 = vpop.permute.xlu0 %475
        %v477 = vsel %vm440, %v474, 0.0
        %v478 = vsel %vm440, %v476, 0.0
        %v479 = vlaneseq
        %v480 = vshrl.u32 %v479, 7
        %v481 = vsub.s32 5, %v480
        %v482 = vrot.slane %v402, %v481
        %v483 = vmul.f32 %v477, %v482
        %v484 = vmul.f32 %v478, %v482
        %v485 = vadd.f32 %v471, %v483
        %v486 = vadd.f32 %v472, %v484
        %v487 = vrot.slane %v395, 1
        %v488 = vrot.slane %v396, 1
        %vm489 = vcmp.lt.s32.totalorder %v398, 7
        %v490 = vsel %vm489, %v487, %v488
        %v491 = vsel %vm489, %v488, %v487
        %vm492 = vcmp.lt.s32.totalorder %v398, 15
        %vm493 = vcmp.lt.s32.totalorder %v399, 15
        %v494 = vsel %vm492, %v490, 0.0
        %v495 = vsel %vm493, %v491, 0.0
        %496 = vrot.lane.b32.xlu0 %v494, 8
        %v497 = vpop.permute.xlu0 %496
        %498 = vrot.lane.b32.xlu0 %v495, 8
        %v499 = vpop.permute.xlu0 %498
        %v500 = vsel %vm417, %v497, 0.0
        %v501 = vsel %vm417, %v499, 0.0
        %v502 = vlaneseq
        %v503 = vshrl.u32 %v502, 7
        %v504 = vsub.s32 6, %v503
        %v505 = vrot.slane %v402, %v504
        %v506 = vmul.f32 %v500, %v505
        %v507 = vmul.f32 %v501, %v505
        %v508 = vadd.f32 %v485, %v506
        %v509 = vadd.f32 %v486, %v507
        %v510 = vlaneseq
        %v511 = vshrl.u32 %v510, 7
        %v512 = vsub.s32 7, %v511
        %v513 = vrot.slane %v402, %v512
        %v514 = vmul.f32 %v494, %v513
        %v515 = vmul.f32 %v495, %v513
        %v516 = vadd.f32 %v508, %v514
        %v517 = vadd.f32 %v509, %v515
        %518 = vrot.lane.b32.xlu0 %v494, 120
        %v519 = vpop.permute.xlu0 %518
        %520 = vrot.lane.b32.xlu0 %v495, 120
        %v521 = vpop.permute.xlu0 %520
        %v522 = vsel %vm440, %v519, 0.0
        %v523 = vsel %vm440, %v521, 0.0
        %v524 = vlaneseq
        %v525 = vshrl.u32 %v524, 7
        %v526 = vsub.s32 0, %v525
        %v527 = vrot.slane %v403, %v526
        %v528 = vmul.f32 %v522, %v527
        %v529 = vmul.f32 %v523, %v527
        %v530 = vadd.f32 %v516, %v528
        %v531 = vadd.f32 %v517, %v529
        %v532 = vpack.c.bf16 %v531, %v530
        %v533 = vld [vmem:[#allocation10] sm:$0xf]
        %v534 = vld [vmem:[#allocation10 + $0x4] sm:$0xf]
        %v535 = vld [vmem:[#allocation10 + $0x8] sm:$0xf]
        %v536 = vld [vmem:[#allocation10 + $0xc] sm:$0xf]
        %v537 = vld [vmem:[#allocation10 + $0x10] sm:$0xf]
        %v538 = vld [vmem:[#allocation10 + $0x14] sm:$0xf]
        %v539 = vld [vmem:[#allocation10 + $0x18] sm:$0xf]
        %v540 = vld [vmem:[#allocation10 + $0x1c] sm:$0xf]
        %v541 = vld [vmem:[#allocation10 + $0x20] sm:$0xf]
        %v542 = vld [vmem:[#allocation10 + $0x24] sm:$0xf]
        %v543 = vld [vmem:[#allocation10 + $0x28] sm:$0xf]
        %v544 = vld [vmem:[#allocation10 + $0x2c] sm:$0xf]
        %v545 = vld [vmem:[#allocation10 + $0x30] sm:$0xf]
        %v546 = vld [vmem:[#allocation10 + $0x34] sm:$0xf]
        %v547 = vld [vmem:[#allocation10 + $0x38] sm:$0xf]
        %v548 = vld [vmem:[#allocation10 + $0x3c] sm:$0xf]
        %v565 = vunpack.c.l.b16 %v533
        %v566 = vunpack.c.l.b16 %v534
        %v567 = vunpack.c.l.b16 %v535
        %v568 = vunpack.c.l.b16 %v536
        %v569 = vunpack.c.l.b16 %v537
        %v570 = vunpack.c.l.b16 %v538
        %v571 = vunpack.c.l.b16 %v539
        %v572 = vunpack.c.l.b16 %v540
        %v573 = vunpack.c.l.b16 %v541
        %v574 = vunpack.c.l.b16 %v542
        %v575 = vunpack.c.l.b16 %v543
        %v576 = vunpack.c.l.b16 %v544
        %v577 = vunpack.c.l.b16 %v545
        %v578 = vunpack.c.l.b16 %v546
        %v579 = vunpack.c.l.b16 %v547
        %v580 = vunpack.c.l.b16 %v548
        %v581 = vpack.c.b16 %v566, %v565
        %v582 = vpack.c.b16 %v568, %v567
        %v583 = vpack.c.b16 %v570, %v569
        %v584 = vpack.c.b16 %v572, %v571
        %v585 = vpack.c.b16 %v574, %v573
        %v586 = vpack.c.b16 %v576, %v575
        %v587 = vpack.c.b16 %v578, %v577
        %v588 = vpack.c.b16 %v580, %v579
        %597 = vmatprep.subr.bf16.mxu0 0
        %598 = vmatpush1.bf16.msra.mxu0 %v581
        %599 = vmatprep.subr.bf16.mxu0 0
        %600 = vmatpush1.bf16.msra.mxu0 %v582
        %601 = vmatprep.subr.bf16.mxu0 0
        %602 = vmatpush1.bf16.msra.mxu0 %v583
        %603 = vmatprep.subr.bf16.mxu0 0
        %604 = vmatpush1.bf16.msra.mxu0 %v584
        %605 = vmatprep.subr.bf16.mxu0 0
        %606 = vmatpush1.bf16.msra.mxu0 %v585
        %607 = vmatprep.subr.bf16.mxu0 0
        %608 = vmatpush1.bf16.msra.mxu0 %v586
        %609 = vmatprep.subr.bf16.mxu0 0
        %610 = vmatpush1.bf16.msra.mxu0 %v587
        %611 = vmatprep.subr.bf16.mxu0 0
        %612 = vmatpush1.bf16.msra.mxu0 %v588
        %613 = vmatprep.subr.bf16.mxu0 0
        %614 = vmatpush1.bf16.msra.mxu0 0
        %615 = vmatprep.subr.bf16.mxu0 0
        %616 = vmatpush1.bf16.msra.mxu0 0
        %617 = vmatprep.subr.bf16.mxu0 0
        %618 = vmatpush1.bf16.msra.mxu0 0
        %619 = vmatprep.subr.bf16.mxu0 0
        %620 = vmatpush1.bf16.msra.mxu0 0
        %621 = vmatprep.subr.bf16.mxu0 0
        %622 = vmatpush1.bf16.msra.mxu0 0
        %623 = vmatprep.subr.bf16.mxu0 0
        %624 = vmatpush1.bf16.msra.mxu0 0
        %625 = vmatprep.subr.bf16.mxu0 0
        %626 = vmatpush1.bf16.msra.mxu0 0
        %627 = vmatprep.subr.bf16.mxu0 0
        %628 = vmatpush1.bf16.msra.mxu0 0
        %629 = vmatprep.mubr.bf16.mxu0 0
        %630 = vmatmul.mubr.bf16.gmra.mrb[0].mxu0 %v532
        %v631 = vpop.f32.mrb[0].mxu0
        %v632 = vadd.f32 0.0, %v631
        %v633 = vpop.f32.mrb[0].mxu0
        %v634 = vpop.f32.mrb[0].mxu0
        %v635 = vadd.f32 0.0, %v634
        %v636 = vpop.f32.mrb[0].mxu0
        %637 = vdwg.mxu0
        %v638 = vld [vmem:[%s5] sm:$0x1]
        %v640 = vlaneseq
        %v641 = vshrl.u32 %v640, 7
        %v642 = vsub.s32 0, %v641
        %v643 = vrot.slane %v638, %v642
        %v645 = vmul.f32 %v632, %v643
        %v646 = vmul.f32 %v635, %v643
        %v647 = vld [vmem:[%s6] sm:$0x1]
        %v649 = vlaneseq
        %v650 = vshrl.u32 %v649, 7
        %v651 = vsub.s32 0, %v650
        %v652 = vrot.slane %v647, %v651
        %v654 = vadd.f32 %v645, %v652
        %v655 = vadd.f32 %v646, %v652
        %v656 = vxor.u32 %v654, 2147483648
        %v657 = vxor.u32 %v655, 2147483648
        %v658 = vmul.f32 %v656, 1.442695
        %v659 = vpow.pop %v658
        %v660 = vmul.f32 %v657, 1.442695
        %v661 = vpow.pop %v660
        %v662 = vadd.f32 %v659, 1.0
        %v663 = vadd.f32 %v661, 1.0
        %v664 = vrcp.pop %v662
        %v665 = vmul.f32 1.0, %v664
        %v666 = vrcp.pop %v663
        %v667 = vmul.f32 1.0, %v666
        %v668 = vmul.f32 %v654, %v665
        %v669 = vmul.f32 %v655, %v667
        %670 = vst [vmem:[%s377] sm:$0xff] %v668
        %671 = vst [vmem:[%s377 + $0x8] sm:$0xff] %v669
        %s672 = sand.u32 %s194, 1
        %s673 = scalar_lea.sflag [#allocation4], %s672
        %s674 = sand.u32 %s194, 1
        %s675 = smul.addr %s674, 16
        %s676 = scalar_lea.vmem [#allocation12], %s675
        // Predicated region
        $region69: #{tpu_custom_call.1} parent=47 // pred_check
          %p677 = pneg %p204
        $region70: #{tpu_custom_call.1} parent=47 // pred_check_branch
          %679 = sbr.rel (%p677) target = $region72
        $region71: #{tpu_custom_call.1} parent=47 // pred_region
          %s681 = ssub.s32 256, 256
          %682 = vsyncadd %s673, %s681
          %s683 = smul.addr %s29, 2
          %s684 = smul.addr %s683, 128
          %s685 = scalar_lea.hbm %s7, %s684
          %s686 = sshll.u32 %s676, 4
          %s687 = int_to_ptr.vmem [resolvable:$true] %s686
          %692 = dma.vmem_to_hbm [thread:$0]  %s687, 256, %s685, %s673, 128, 128, 8
        $region72: #{tpu_custom_call.1} parent=47 // pred_fallthru
          _
      $region48: #{tpu_custom_call.1} parent=5 // pred_fallthru
        _
      %p693 = scmp.le.s32.totalorder 2, %s24
      // Predicated region
      $region73: #{tpu_custom_call.1} parent=5 // pred_check
        %p694 = pneg %p693
      $region74: #{tpu_custom_call.1} parent=5 // pred_check_branch
        %696 = sbr.rel (%p694) target = $region76
      $region75: #{tpu_custom_call.1} parent=5 // pred_region
        %s697 = ssub.s32 %s24, 2
        // Predicated region
        $region77: #{tpu_custom_call.1} parent=75 // pred_check
          %p698 = pneg %p210
        $region78: #{tpu_custom_call.1} parent=75 // pred_check_branch
          %700 = sbr.rel (%p698) target = $region80
        $region79: #{tpu_custom_call.1} parent=75 // pred_region
          %s701 = sand.u32 %s195, 1
          %s702 = scalar_lea.sflag [#allocation4], %s701
          %s703 = sand.u32 %s195, 1
          %s704 = smul.addr %s703, 16
          %s705 = scalar_lea.vmem [#allocation12], %s704
          %706 = dma.done %s702, 256
        $region80: #{tpu_custom_call.1} parent=75 // pred_fallthru
          _
      $region76: #{tpu_custom_call.1} parent=5 // pred_fallthru
        _
    $region6: #{tpu_custom_call.1} parent=1 // loop_footer
      %s28 = sadd.s32 1, %s24
    $region7: #{tpu_custom_call.1} parent=1 // loop_footer_branch
      %23 = sbr.rel target = $region3
    $region8: #{tpu_custom_call.1} parent=1 // loop_exit
      _
    %707 = vsyncpa [#allocation3], 1
    %s708 = scalar_lea.sflag [#allocation3], 1
    %709 = vsyncpa %s708, 1
    %710 = vsyncpa [#allocation8], 1
    %s711 = scalar_lea.sflag [#allocation8], 1
    %712 = vsyncpa %s711, 1
    %713 = vsyncpa [#allocation11], 1
    %714 = vsyncpa [#allocation4], 1
    %s715 = scalar_lea.sflag [#allocation4], 1
    %716 = vsyncpa %s715, 1
    %717 = vsyncpa [#allocation5], 1
    %s718 = scalar_lea.sflag [#allocation5], 1
    %719 = vsyncpa %s718, 1

</llo_original>
